<compile_context>
chip_gen: v7x
topology: tpu7x:2x2x1
jax: 0.10.0
libtpu: 0.0.40
codegen_flags: <defaults>
</compile_context>

<pallas_src>
import functools

import numpy as np
import jax
import jax.numpy as jnp
from jax.experimental import pallas as pl
from jax.experimental.pallas import tpu as pltpu


def _clip_kernel(x_ref, o_ref, *, low, high):
    # Two VPU ops per element (max then min) == torch.clamp semantics
    # (high wins if low > high; NaNs propagate).  low/high are Python floats,
    # folded as immediate operands.
    o_ref[...] = jnp.minimum(jnp.maximum(x_ref[...], low), high)


_LANES = 128          # full vreg lane width -> unmasked loads/stores
_BLOCK_ROWS = 4096    # (4096, 128) f32 = 2 MiB/block; in+out x double-buffer ~ 8 MiB


def clip_pallas(x, low, high):
    """Clamp x to [low, high] with a lane-dense Pallas TPU kernel.

    Small inputs (<= _BLOCK_ROWS rows after the (N, 128) reshape) use a single
    gridless whole-array block; larger inputs tile over row blocks with a
    "parallel" grid axis (megacore sharding on v7x) while keeping the
    double-buffered VMEM footprint well under every generation's scoped limit.
    """
    kernel = functools.partial(_clip_kernel, low=float(low), high=float(high))
    orig_shape = x.shape
    n = x.size

    # --- lane-dense 2D view (contiguous reshape; essentially free) ----------
    pad = (-n) % _LANES
    flat = x.reshape(-1)
    if pad:
        flat = jnp.concatenate([flat, jnp.zeros((pad,), dtype=x.dtype)])
    rows = flat.size // _LANES
    x2d = flat.reshape(rows, _LANES)

    if rows <= _BLOCK_ROWS:
        # Small-tensor path: one gridless block == whole array, minimum overhead.
        y2d = pl.pallas_call(
            kernel,
            out_shape=jax.ShapeDtypeStruct(x2d.shape, x2d.dtype),
            input_output_aliases={0: 0},
        )(x2d)
    else:
        # Large-tensor path: big lane-dense row blocks, parallel row-block axis.
        y2d = pl.pallas_call(
            kernel,
            out_shape=jax.ShapeDtypeStruct(x2d.shape, x2d.dtype),
            grid=(pl.cdiv(rows, _BLOCK_ROWS),),
            in_specs=[pl.BlockSpec((_BLOCK_ROWS, _LANES), lambda i: (i, 0))],
            out_specs=pl.BlockSpec((_BLOCK_ROWS, _LANES), lambda i: (i, 0)),
            input_output_aliases={0: 0},
            compiler_params=pltpu.CompilerParams(
                dimension_semantics=("parallel",)),
        )(x2d)

    y = y2d.reshape(-1)
    if pad:
        y = y[:n]
    return y.reshape(orig_shape)


if __name__ == "__main__":
    # Deterministic "module parameters" (FClipTest.__init__ draws these from
    # np.random.uniform; seed numpy for determinism).
    rng = np.random.RandomState(0)
    low = float(rng.uniform(-1, 1))   # in [-1, 1)
    high = float(rng.uniform(1, 2))   # in [1, 2)

    # Deterministic input, NCHW like a PyTorch tensor.
    key = jax.random.PRNGKey(0)
    x = jax.random.normal(key, (2, 4, 16, 16), dtype=jnp.float32) * 2.0

    y = clip_pallas(x, low, high)
    y = jax.block_until_ready(y)

    # Reference check against plain JAX clamp (bit-exact: same f32 immediates).
    y_ref = jnp.clip(x, low, high)
    np.testing.assert_allclose(np.asarray(y), np.asarray(y_ref), rtol=0, atol=0)

    print("KERNEL_OK")
</pallas_src>

<mosaic_0001>
module attributes {stable_mosaic.version = 11 : i64} {
  func.func @_clip_kernel(%arg0: memref<16x128xf32, #tpu.memory_space<vmem>>, %arg1: memref<16x128xf32, #tpu.memory_space<vmem>>) attributes {dimension_semantics = [], scalar_prefetch = 0 : i64, scratch_operands = 0 : i64, tpu.core_type = #tpu.core_type<tc>} {
    %c0 = arith.constant 0 : index
    %c0_0 = arith.constant 0 : index
    %0 = vector.load %arg0[%c0, %c0_0] : memref<16x128xf32, #tpu.memory_space<vmem>>, vector<16x128xf32>
    %cst = arith.constant 0.0976270064 : f32
    %1 = vector.broadcast %cst : f32 to vector<16x128xf32>
    %2 = arith.maximumf %0, %1 : vector<16x128xf32>
    %cst_1 = arith.constant 1.71518934 : f32
    %3 = vector.broadcast %cst_1 : f32 to vector<16x128xf32>
    %4 = arith.minimumf %2, %3 : vector<16x128xf32>
    %c0_2 = arith.constant 0 : index
    %c0_3 = arith.constant 0 : index
    %5 = vector.load %arg1[%c0_2, %c0_3] : memref<16x128xf32, #tpu.memory_space<vmem>>, vector<16x128xf32>
    tpu.vector_store %arg1[%c0_2, %c0_3], %4 {strides = array<i32>} : memref<16x128xf32, #tpu.memory_space<vmem>>, vector<16x128xf32>,
    return
  }
}

</mosaic_0001>

<llo_original>
// kernel: tpu_custom_call.1
$region0: #{tpu_custom_call.1}
  #allocation0 [shape = 'u32[]', space=smem, size = 0x4, offset = 0x4, fixed_abs, tag = 'smem constant byte address 0x4 - core index']
  #allocation1 [shape = 'u32[144,128]{1,0:T(1,128)}', space=vmem, size = 0x12000, scoped, tag = 'internal scratch']
  %s0 = inlined_call_operand.hbm [shape: f32[16,128], index: 0, kind: input, shape index: {}, may-alias: {0,1}]
  %s1 = inlined_call_operand.hbm [shape: f32[16,128], index: 1, kind: output, shape index: {}, may-alias: {0,1}]
  %s2 = sld [smem:[#allocation0]]
  $region18: #{tpu_custom_call.1} parent=0
    _
  %s4 = ssub.s32 1, %s2
  %s5 = scalar_select 0, %s4, %s2
  $region1: #{tpu_custom_call.1} parent=0
    #allocation2 [shape = 'u8[8192]{0}', space=vmem, size = 0x2000, scoped, tag = 'input window, operand 0, single buffered']
    #allocation3 [shape = 's32[1]{0}', space=sflag, size = 0x4, scoped, tag = 'scoped memory for tpu_custom_call.1']
    #allocation4 [shape = 's32[1]{0}', space=sflag, size = 0x4, scoped, tag = 'scoped memory for tpu_custom_call.1']
    #allocation5 [shape = 'u8[8192]{0}', space=vmem, size = 0x2000, scoped, tag = 'output window, operand 0, single buffered']
    %6 = vsyncpa [#allocation3], 0
    %7 = vsyncpa [#allocation4], 0
    // Predicated region
    $region2: #{tpu_custom_call.1} parent=1 // pred_check
      _
    $region3: #{tpu_custom_call.1} parent=1 // pred_check_branch
      %9 = sbr.rel (0) target = $region5
    $region4: #{tpu_custom_call.1} parent=1 // pred_region
      %s11 = ssub.s32 256, 256
      %12 = vsyncadd [#allocation3], %s11
      %s13 = sshll.u32 [#allocation2], 4
      %s14 = int_to_ptr.vmem [resolvable:$true] %s13
      %19 = dma.hbm_to_vmem [thread:$0]  %s0, 256, %s14, [#allocation3], 128, 128, 8
    $region5: #{tpu_custom_call.1} parent=1 // pred_fallthru
      _
    // Predicated region
    $region6: #{tpu_custom_call.1} parent=1 // pred_check
      _
    $region7: #{tpu_custom_call.1} parent=1 // pred_check_branch
      %21 = sbr.rel (0) target = $region9
    $region8: #{tpu_custom_call.1} parent=1 // pred_region
      %22 = dma.done [#allocation3], 256
    $region9: #{tpu_custom_call.1} parent=1 // pred_fallthru
      _
    %v23 = vld [vmem:[#allocation2] sm:$0xff]
    %v24 = vld [vmem:[#allocation2 + $0x8] sm:$0xff]
    %v25 = vmax.f32 %v23, 0.09762701
    %v26 = vmax.f32 %v24, 0.09762701
    %v27 = vmin.f32 %v25, 1.7151893
    %v28 = vmin.f32 %v26, 1.7151893
    %29 = vst [vmem:[#allocation5] sm:$0xff] %v27
    %30 = vst [vmem:[#allocation5 + $0x8] sm:$0xff] %v28
    // Predicated region
    $region10: #{tpu_custom_call.1} parent=1 // pred_check
      _
    $region11: #{tpu_custom_call.1} parent=1 // pred_check_branch
      %32 = sbr.rel (0) target = $region13
    $region12: #{tpu_custom_call.1} parent=1 // pred_region
      %s34 = ssub.s32 256, 256
      %35 = vsyncadd [#allocation4], %s34
      %s36 = sshll.u32 [#allocation5], 4
      %s37 = int_to_ptr.vmem [resolvable:$true] %s36
      %42 = dma.vmem_to_hbm [thread:$0]  %s37, 256, %s1, [#allocation4], 128, 128, 8
    $region13: #{tpu_custom_call.1} parent=1 // pred_fallthru
      _
    // Predicated region
    $region14: #{tpu_custom_call.1} parent=1 // pred_check
      _
    $region15: #{tpu_custom_call.1} parent=1 // pred_check_branch
      %44 = sbr.rel (0) target = $region17
    $region16: #{tpu_custom_call.1} parent=1 // pred_region
      %45 = dma.done [#allocation4], 256
    $region17: #{tpu_custom_call.1} parent=1 // pred_fallthru
      _
    %46 = vsyncpa [#allocation3], 1
    %47 = vsyncpa [#allocation4], 1

</llo_original>
